<compile_context>
chip_gen: v6e
topology: v6e:2x2x1
jax: 0.10.0
libtpu: 0.0.40
codegen_flags: <defaults>
</compile_context>

<pallas_src>
import jax
import jax.numpy as jnp
from jax.experimental import pallas as pl
from jax.experimental.pallas import tpu as pltpu

OUT_PAD = 8                      # padded logit lanes (real logits = 2)
BLOCK_BATCH = 4096               # upper bound on rows per grid step
VMEM_BUDGET = 40 * 1024 * 1024   # working-set target (v7x has 64 MiB physical)


def mlp_kernel(x_ref, w1_ref, b1_ref, w2_ref, b2_ref, w3_ref, b3_ref, o_ref):
    """Fused 3-layer MLP (eval mode). BN folded into Linear, Dropout = identity."""
    # In-kernel bf16 cast: hides under the input DMA, avoids a wrapper pass.
    x = x_ref[...].astype(jnp.bfloat16)

    # ---- layer1: Linear(in, 256) [+ folded BN] + LeakyReLU(0.1) -------------
    h = jnp.dot(x, w1_ref[...], preferred_element_type=jnp.float32)
    h = h + b1_ref[...]                    # folded Linear+BN bias (f32)
    h = jnp.maximum(h, 0.1 * h)            # LeakyReLU(0.1), single vmax
    # Dropout(0.3): identity in eval mode.

    # ---- layer2: Linear(256, 128) [+ folded BN] + LeakyReLU(0.1) ------------
    h = jnp.dot(h.astype(jnp.bfloat16), w2_ref[...],
                preferred_element_type=jnp.float32)
    h = h + b2_ref[...]
    h = jnp.maximum(h, 0.1 * h)
    # Dropout(0.2): identity in eval mode.

    # ---- layer3: Linear(128, 2), zero-padded to OUT_PAD lanes ----------------
    o_ref[...] = (
        jnp.dot(h.astype(jnp.bfloat16), w3_ref[...],
                preferred_element_type=jnp.float32)
        + b3_ref[...]
    )


def init_params(key, input_dim):
    """PyTorch-default-style init: Linear uniform(±1/sqrt(fan_in)); BN at init
    (gamma=1, beta=0, running_mean=0, running_var=1)."""
    dims = [(input_dim, 256), (256, 128), (128, 2)]
    params = {}
    for idx, (fan_in, fan_out) in enumerate(dims, start=1):
        key, kw, kb = jax.random.split(key, 3)
        bound = 1.0 / jnp.sqrt(float(fan_in))
        params[f"w{idx}"] = jax.random.uniform(
            kw, (fan_in, fan_out), jnp.float32, -bound, bound)
        params[f"b{idx}"] = jax.random.uniform(
            kb, (1, fan_out), jnp.float32, -bound, bound)
    for idx, n in [(1, 256), (2, 128)]:
        params[f"gamma{idx}"] = jnp.ones((1, n), jnp.float32)
        params[f"beta{idx}"] = jnp.zeros((1, n), jnp.float32)
        params[f"mean{idx}"] = jnp.zeros((1, n), jnp.float32)
        params[f"var{idx}"] = jnp.ones((1, n), jnp.float32)
    return params


def fold_params(params, eps=1e-5):
    """Host-side transform: fold eval-mode BatchNorm into the Linear weights
    and biases, cast matmul weights to bf16, and zero-pad layer3 to a small
    (128, OUT_PAD) weight / (1, OUT_PAD) bias (only 8 lanes, not 128)."""
    folded = {}
    for idx in (1, 2):
        s = params[f"gamma{idx}"] / jnp.sqrt(params[f"var{idx}"] + eps)
        t = params[f"beta{idx}"] - params[f"mean{idx}"] * s
        folded[f"w{idx}"] = (params[f"w{idx}"] * s).astype(jnp.bfloat16)
        folded[f"b{idx}"] = (params[f"b{idx}"] * s + t).astype(jnp.float32)

    w3, b3 = params["w3"], params["b3"]
    out_dim = w3.shape[1]
    w3p = jnp.zeros((w3.shape[0], OUT_PAD), jnp.float32).at[:, :out_dim].set(w3)
    b3p = jnp.zeros((1, OUT_PAD), jnp.float32).at[:, :out_dim].set(b3)
    folded["w3"] = w3p.astype(jnp.bfloat16)
    folded["b3"] = b3p.astype(jnp.float32)
    return folded, out_dim


def _round_up(n, m):
    return (n + m - 1) // m * m


def _pick_batch_tile(batch, input_dim, block_batch, vmem_budget):
    """Batch rows per grid step: multiple of 16, >=2 grid steps when batch
    allows (v7x megacore), bounded by a VMEM working-set budget."""
    # Per-row VMEM bytes: double-buffered native-dtype x, its bf16 cast,
    # f32 h1/h2 intermediates, double-buffered f32 padded output.
    per_row = (2 * 4 * input_dim) + (2 * input_dim) \
        + 4 * 256 + 4 * 128 + (2 * 4 * OUT_PAD)
    # Single-buffered resident weights (bf16) + biases (f32).
    resident = 2 * (input_dim * 256 + 256 * 128 + 128 * OUT_PAD) \
        + 4 * (256 + 128 + OUT_PAD)
    fit = max(16, (vmem_budget - resident) // max(per_row, 1))
    tb = min(block_batch, fit)
    # Ensure >= 2 grid steps so both v7x TensorCores get work for moderate batch.
    tb = min(tb, _round_up(pl.cdiv(batch, 2), 16))
    tb = max(16, (tb // 16) * 16)   # multiple of 16 (bf16 sublane packing)
    est_bytes = resident + tb * per_row
    vmem_limit = int(min(64 << 20, max(16 << 20, 2 * est_bytes)))
    return tb, vmem_limit


def _build_call(input_dim, tb, padded_batch, folded, vmem_limit, weight_mode):
    def resident(arr):
        if weight_mode is None:
            return pl.BlockSpec(arr.shape, lambda i: (0, 0))
        # Constant index_map -> fetched once; single buffer saves VMEM.
        return pl.BlockSpec(arr.shape, lambda i: (0, 0), pipeline_mode=weight_mode)

    return pl.pallas_call(
        mlp_kernel,
        out_shape=jax.ShapeDtypeStruct((padded_batch, OUT_PAD), jnp.float32),
        grid=(pl.cdiv(padded_batch, tb),),
        in_specs=[
            pl.BlockSpec((tb, input_dim), lambda i: (i, 0)),   # x: streamed
            resident(folded["w1"]), resident(folded["b1"]),
            resident(folded["w2"]), resident(folded["b2"]),
            resident(folded["w3"]), resident(folded["b3"]),
        ],
        out_specs=pl.BlockSpec((tb, OUT_PAD), lambda i: (i, 0)),
        compiler_params=pltpu.CompilerParams(
            dimension_semantics=("parallel",),   # shard batch across TCs (v7x)
            vmem_limit_bytes=vmem_limit,
        ),
    )


def neuralnet_forward(x, folded, out_dim, *, block_batch=BLOCK_BATCH,
                      vmem_budget=VMEM_BUDGET):
    batch, input_dim = x.shape
    tb, vmem_limit = _pick_batch_tile(batch, input_dim, block_batch, vmem_budget)
    padded_batch = _round_up(batch, tb)

    xp = x  # no wrapper-side dtype pass; bf16 cast happens inside the kernel
    if padded_batch != batch:
        xp = jnp.pad(xp, ((0, padded_batch - batch), (0, 0)))

    args = (xp, folded["w1"], folded["b1"], folded["w2"], folded["b2"],
            folded["w3"], folded["b3"])
    try:
        out_padded = _build_call(input_dim, tb, padded_batch, folded,
                                 vmem_limit, pl.Buffered(1))(*args)
    except Exception:
        # Fallback: default double-buffered resident weights (small VMEM cost).
        out_padded = _build_call(input_dim, tb, padded_batch, folded,
                                 vmem_limit, None)(*args)

    # Strip batch padding and the (small) lane padding of layer3.
    return out_padded[:batch, :out_dim]


if __name__ == "__main__":
    key = jax.random.PRNGKey(0)
    key, kx, kp = jax.random.split(key, 3)

    batch, input_dim = 8, 32
    x = jax.random.normal(kx, (batch, input_dim), jnp.float32)

    params = init_params(kp, input_dim)
    folded, out_dim = fold_params(params)

    out = neuralnet_forward(x, folded, out_dim)
    jax.block_until_ready(out)
    assert out.shape == (batch, 2) and out.dtype == jnp.float32
    print("KERNEL_OK")
</pallas_src>

<mosaic_0001>
module attributes {stable_mosaic.version = 11 : i64} {
  func.func @mlp_kernel(%arg0: i32, %arg1: memref<16x32xf32, #tpu.memory_space<vmem>>, %arg2: memref<32x256xbf16, #tpu.memory_space<vmem>>, %arg3: memref<1x256xf32, #tpu.memory_space<vmem>>, %arg4: memref<256x128xbf16, #tpu.memory_space<vmem>>, %arg5: memref<1x128xf32, #tpu.memory_space<vmem>>, %arg6: memref<128x8xbf16, #tpu.memory_space<vmem>>, %arg7: memref<1x8xf32, #tpu.memory_space<vmem>>, %arg8: memref<16x8xf32, #tpu.memory_space<vmem>>) attributes {dimension_semantics = [#tpu.dimension_semantics<parallel>], iteration_bounds = array<i64: 1>, scalar_prefetch = 0 : i64, scratch_operands = 0 : i64, tpu.core_type = #tpu.core_type<tc>, window_params = [{transform_indices = @transform_0, window_bounds = array<i64: 16, 32>}, {pipeline_mode = #tpu.pipeline_mode<synchronous>, transform_indices = @transform_1, window_bounds = array<i64: 32, 256>}, {pipeline_mode = #tpu.pipeline_mode<synchronous>, transform_indices = @transform_2, window_bounds = array<i64: 1, 256>}, {pipeline_mode = #tpu.pipeline_mode<synchronous>, transform_indices = @transform_3, window_bounds = array<i64: 256, 128>}, {pipeline_mode = #tpu.pipeline_mode<synchronous>, transform_indices = @transform_4, window_bounds = array<i64: 1, 128>}, {pipeline_mode = #tpu.pipeline_mode<synchronous>, transform_indices = @transform_5, window_bounds = array<i64: 128, 8>}, {pipeline_mode = #tpu.pipeline_mode<synchronous>, transform_indices = @transform_6, window_bounds = array<i64: 1, 8>}, {transform_indices = @transform_7, window_bounds = array<i64: 16, 8>}]} {
    %c0 = arith.constant 0 : index
    %c0_0 = arith.constant 0 : index
    %0 = vector.load %arg1[%c0, %c0_0] : memref<16x32xf32, #tpu.memory_space<vmem>>, vector<16x32xf32>
    %1 = arith.truncf %0 : vector<16x32xf32> to vector<16x32xbf16>
    %c0_1 = arith.constant 0 : index
    %c0_2 = arith.constant 0 : index
    %2 = vector.load %arg2[%c0_1, %c0_2] : memref<32x256xbf16, #tpu.memory_space<vmem>>, vector<32x256xbf16>
    %cst = arith.constant dense<0.000000e+00> : vector<16x256xf32>
    %3 = tpu.matmul %1, %2, %cst {dimension_numbers = #tpu.dot_dimension_numbers<[1], [0], [0], [1], [0, 0, 1, 1], [], []>} : vector<16x32xbf16>, vector<32x256xbf16>, vector<16x256xf32> -> vector<16x256xf32>
    %c0_3 = arith.constant 0 : index
    %c0_4 = arith.constant 0 : index
    %4 = vector.load %arg3[%c0_3, %c0_4] : memref<1x256xf32, #tpu.memory_space<vmem>>, vector<1x256xf32>
    %5 = vector.broadcast %4 : vector<1x256xf32> to vector<16x256xf32>
    %6 = arith.addf %3, %5 : vector<16x256xf32>
    %cst_5 = arith.constant 1.000000e-01 : f32
    %7 = vector.broadcast %cst_5 : f32 to vector<16x256xf32>
    %8 = arith.mulf %7, %6 : vector<16x256xf32>
    %9 = arith.maximumf %6, %8 : vector<16x256xf32>
    %10 = arith.truncf %9 : vector<16x256xf32> to vector<16x256xbf16>
    %c0_6 = arith.constant 0 : index
    %c0_7 = arith.constant 0 : index
    %11 = vector.load %arg4[%c0_6, %c0_7] : memref<256x128xbf16, #tpu.memory_space<vmem>>, vector<256x128xbf16>
    %cst_8 = arith.constant dense<0.000000e+00> : vector<16x128xf32>
    %12 = tpu.matmul %10, %11, %cst_8 {dimension_numbers = #tpu.dot_dimension_numbers<[1], [0], [0], [1], [0, 0, 1, 1], [], []>} : vector<16x256xbf16>, vector<256x128xbf16>, vector<16x128xf32> -> vector<16x128xf32>
    %c0_9 = arith.constant 0 : index
    %c0_10 = arith.constant 0 : index
    %13 = vector.load %arg5[%c0_9, %c0_10] : memref<1x128xf32, #tpu.memory_space<vmem>>, vector<1x128xf32>
    %14 = vector.broadcast %13 : vector<1x128xf32> to vector<16x128xf32>
    %15 = arith.addf %12, %14 : vector<16x128xf32>
    %cst_11 = arith.constant 1.000000e-01 : f32
    %16 = vector.broadcast %cst_11 : f32 to vector<16x128xf32>
    %17 = arith.mulf %16, %15 : vector<16x128xf32>
    %18 = arith.maximumf %15, %17 : vector<16x128xf32>
    %19 = arith.truncf %18 : vector<16x128xf32> to vector<16x128xbf16>
    %c0_12 = arith.constant 0 : index
    %c0_13 = arith.constant 0 : index
    %20 = vector.load %arg6[%c0_12, %c0_13] : memref<128x8xbf16, #tpu.memory_space<vmem>>, vector<128x8xbf16>
    %cst_14 = arith.constant dense<0.000000e+00> : vector<16x8xf32>
    %21 = tpu.matmul %19, %20, %cst_14 {dimension_numbers = #tpu.dot_dimension_numbers<[1], [0], [0], [1], [0, 0, 1, 1], [], []>} : vector<16x128xbf16>, vector<128x8xbf16>, vector<16x8xf32> -> vector<16x8xf32>
    %c0_15 = arith.constant 0 : index
    %c0_16 = arith.constant 0 : index
    %22 = vector.load %arg7[%c0_15, %c0_16] : memref<1x8xf32, #tpu.memory_space<vmem>>, vector<1x8xf32>
    %23 = vector.broadcast %22 : vector<1x8xf32> to vector<16x8xf32>
    %24 = arith.addf %21, %23 : vector<16x8xf32>
    %c0_17 = arith.constant 0 : index
    %c0_18 = arith.constant 0 : index
    %25 = vector.load %arg8[%c0_17, %c0_18] : memref<16x8xf32, #tpu.memory_space<vmem>>, vector<16x8xf32>
    tpu.vector_store %arg8[%c0_17, %c0_18], %24 {strides = array<i32>} : memref<16x8xf32, #tpu.memory_space<vmem>>, vector<16x8xf32>,
    return
  }
  func.func @transform_0(%arg0: i32) -> (i32, i32) {
    %c0_i32 = arith.constant 0 : i32
    %c0_i32_0 = arith.constant 0 : i32
    return %arg0, %c0_i32 : i32, i32
  }
  func.func @transform_1(%arg0: i32) -> (i32, i32) {
    %c0_i32 = arith.constant 0 : i32
    %c0_i32_0 = arith.constant 0 : i32
    %c0_i32_1 = arith.constant 0 : i32
    return %c0_i32, %c0_i32_0 : i32, i32
  }
  func.func @transform_2(%arg0: i32) -> (i32, i32) {
    %c0_i32 = arith.constant 0 : i32
    %c0_i32_0 = arith.constant 0 : i32
    %c0_i32_1 = arith.constant 0 : i32
    return %c0_i32, %c0_i32_0 : i32, i32
  }
  func.func @transform_3(%arg0: i32) -> (i32, i32) {
    %c0_i32 = arith.constant 0 : i32
    %c0_i32_0 = arith.constant 0 : i32
    %c0_i32_1 = arith.constant 0 : i32
    return %c0_i32, %c0_i32_0 : i32, i32
  }
  func.func @transform_4(%arg0: i32) -> (i32, i32) {
    %c0_i32 = arith.constant 0 : i32
    %c0_i32_0 = arith.constant 0 : i32
    %c0_i32_1 = arith.constant 0 : i32
    return %c0_i32, %c0_i32_0 : i32, i32
  }
  func.func @transform_5(%arg0: i32) -> (i32, i32) {
    %c0_i32 = arith.constant 0 : i32
    %c0_i32_0 = arith.constant 0 : i32
    %c0_i32_1 = arith.constant 0 : i32
    return %c0_i32, %c0_i32_0 : i32, i32
  }
  func.func @transform_6(%arg0: i32) -> (i32, i32) {
    %c0_i32 = arith.constant 0 : i32
    %c0_i32_0 = arith.constant 0 : i32
    %c0_i32_1 = arith.constant 0 : i32
    return %c0_i32, %c0_i32_0 : i32, i32
  }
  func.func @transform_7(%arg0: i32) -> (i32, i32) {
    %c0_i32 = arith.constant 0 : i32
    %c0_i32_0 = arith.constant 0 : i32
    return %arg0, %c0_i32 : i32, i32
  }
}

module attributes {stable_mosaic.version = 11 : i64} {
  func.func @mlp_kernel(%arg0: i32, %arg1: memref<16x32xf32, #tpu.memory_space<vmem>>, %arg2: memref<32x256xbf16, #tpu.memory_space<vmem>>, %arg3: memref<1x256xf32, #tpu.memory_space<vmem>>, %arg4: memref<256x128xbf16, #tpu.memory_space<vmem>>, %arg5: memref<1x128xf32, #tpu.memory_space<vmem>>, %arg6: memref<128x8xbf16, #tpu.memory_space<vmem>>, %arg7: memref<1x8xf32, #tpu.memory_space<vmem>>, %arg8: memref<16x8xf32, #tpu.memory_space<vmem>>) attributes {dimension_semantics = [#tpu.dimension_semantics<parallel>], iteration_bounds = array<i64: 1>, scalar_prefetch = 0 : i64, scratch_operands = 0 : i64, tpu.core_type = #tpu.core_type<tc>, window_params = [{transform_indices = @transform_0, window_bounds = array<i64: 16, 32>}, {pipeline_mode = #tpu.pipeline_mode<synchronous>, transform_indices = @transform_1, window_bounds = array<i64: 32, 256>}, {pipeline_mode = #tpu.pipeline_mode<synchronous>, transform_indices = @transform_2, window_bounds = array<i64: 1, 256>}, {pipeline_mode = #tpu.pipeline_mode<synchronous>, transform_indices = @transform_3, window_bounds = array<i64: 256, 128>}, {pipeline_mode = #tpu.pipeline_mode<synchronous>, transform_indices = @transform_4, window_bounds = array<i64: 1, 128>}, {pipeline_mode = #tpu.pipeline_mode<synchronous>, transform_indices = @transform_5, window_bounds = array<i64: 128, 8>}, {pipeline_mode = #tpu.pipeline_mode<synchronous>, transform_indices = @transform_6, window_bounds = array<i64: 1, 8>}, {transform_indices = @transform_7, window_bounds = array<i64: 16, 8>}]} {
    %c0 = arith.constant 0 : index
    %c0_0 = arith.constant 0 : index
    %0 = vector.load %arg1[%c0, %c0_0] : memref<16x32xf32, #tpu.memory_space<vmem>>, vector<16x32xf32>
    %1 = arith.truncf %0 : vector<16x32xf32> to vector<16x32xbf16>
    %c0_1 = arith.constant 0 : index
    %c0_2 = arith.constant 0 : index
    %2 = vector.load %arg2[%c0_1, %c0_2] : memref<32x256xbf16, #tpu.memory_space<vmem>>, vector<32x256xbf16>
    %cst = arith.constant dense<0.000000e+00> : vector<16x256xf32>
    %3 = tpu.matmul %1, %2, %cst {dimension_numbers = #tpu.dot_dimension_numbers<[1], [0], [0], [1], [0, 0, 1, 1], [], []>} : vector<16x32xbf16>, vector<32x256xbf16>, vector<16x256xf32> -> vector<16x256xf32>
    %c0_3 = arith.constant 0 : index
    %c0_4 = arith.constant 0 : index
    %4 = vector.load %arg3[%c0_3, %c0_4] : memref<1x256xf32, #tpu.memory_space<vmem>>, vector<1x256xf32>
    %5 = vector.broadcast %4 : vector<1x256xf32> to vector<16x256xf32>
    %6 = arith.addf %3, %5 : vector<16x256xf32>
    %cst_5 = arith.constant 1.000000e-01 : f32
    %7 = vector.broadcast %cst_5 : f32 to vector<16x256xf32>
    %8 = arith.mulf %7, %6 : vector<16x256xf32>
    %9 = arith.maximumf %6, %8 : vector<16x256xf32>
    %10 = arith.truncf %9 : vector<16x256xf32> to vector<16x256xbf16>
    %c0_6 = arith.constant 0 : index
    %c0_7 = arith.constant 0 : index
    %11 = vector.load %arg4[%c0_6, %c0_7] : memref<256x128xbf16, #tpu.memory_space<vmem>>, vector<256x128xbf16>
    %cst_8 = arith.constant dense<0.000000e+00> : vector<16x128xf32>
    %12 = tpu.matmul %10, %11, %cst_8 {dimension_numbers = #tpu.dot_dimension_numbers<[1], [0], [0], [1], [0, 0, 1, 1], [], []>} : vector<16x256xbf16>, vector<256x128xbf16>, vector<16x128xf32> -> vector<16x128xf32>
    %c0_9 = arith.constant 0 : index
    %c0_10 = arith.constant 0 : index
    %13 = vector.load %arg5[%c0_9, %c0_10] : memref<1x128xf32, #tpu.memory_space<vmem>>, vector<1x128xf32>
    %14 = vector.broadcast %13 : vector<1x128xf32> to vector<16x128xf32>
    %15 = arith.addf %12, %14 : vector<16x128xf32>
    %cst_11 = arith.constant 1.000000e-01 : f32
    %16 = vector.broadcast %cst_11 : f32 to vector<16x128xf32>
    %17 = arith.mulf %16, %15 : vector<16x128xf32>
    %18 = arith.maximumf %15, %17 : vector<16x128xf32>
    %19 = arith.truncf %18 : vector<16x128xf32> to vector<16x128xbf16>
    %c0_12 = arith.constant 0 : index
    %c0_13 = arith.constant 0 : index
    %20 = vector.load %arg6[%c0_12, %c0_13] : memref<128x8xbf16, #tpu.memory_space<vmem>>, vector<128x8xbf16>
    %cst_14 = arith.constant dense<0.000000e+00> : vector<16x8xf32>
    %21 = tpu.matmul %19, %20, %cst_14 {dimension_numbers = #tpu.dot_dimension_numbers<[1], [0], [0], [1], [0, 0, 1, 1], [], []>} : vector<16x128xbf16>, vector<128x8xbf16>, vector<16x8xf32> -> vector<16x8xf32>
    %c0_15 = arith.constant 0 : index
    %c0_16 = arith.constant 0 : index
    %22 = vector.load %arg7[%c0_15, %c0_16] : memref<1x8xf32, #tpu.memory_space<vmem>>, vector<1x8xf32>
    %23 = vector.broadcast %22 : vector<1x8xf32> to vector<16x8xf32>
    %24 = arith.addf %21, %23 : vector<16x8xf32>
    %c0_17 = arith.constant 0 : index
    %c0_18 = arith.constant 0 : index
    %25 = vector.load %arg8[%c0_17, %c0_18] : memref<16x8xf32, #tpu.memory_space<vmem>>, vector<16x8xf32>
    tpu.vector_store %arg8[%c0_17, %c0_18], %24 {strides = array<i32>} : memref<16x8xf32, #tpu.memory_space<vmem>>, vector<16x8xf32>,
    return
  }
  func.func @transform_0(%arg0: i32) -> (i32, i32) {
    %c0_i32 = arith.constant 0 : i32
    %c0_i32_0 = arith.constant 0 : i32
    return %arg0, %c0_i32 : i32, i32
  }
  func.func @transform_1(%arg0: i32) -> (i32, i32) {
    %c0_i32 = arith.constant 0 : i32
    %c0_i32_0 = arith.constant 0 : i32
    %c0_i32_1 = arith.constant 0 : i32
    return %c0_i32, %c0_i32_0 : i32, i32
  }
  func.func @transform_2(%arg0: i32) -> (i32, i32) {
    %c0_i32 = arith.constant 0 : i32
    %c0_i32_0 = arith.constant 0 : i32
    %c0_i32_1 = arith.constant 0 : i32
    return %c0_i32, %c0_i32_0 : i32, i32
  }
  func.func @transform_3(%arg0: i32) -> (i32, i32) {
    %c0_i32 = arith.constant 0 : i32
    %c0_i32_0 = arith.constant 0 : i32
    %c0_i32_1 = arith.constant 0 : i32
    return %c0_i32, %c0_i32_0 : i32, i32
  }
  func.func @transform_4(%arg0: i32) -> (i32, i32) {
    %c0_i32 = arith.constant 0 : i32
    %c0_i32_0 = arith.constant 0 : i32
    %c0_i32_1 = arith.constant 0 : i32
    return %c0_i32, %c0_i32_0 : i32, i32
  }
  func.func @transform_5(%arg0: i32) -> (i32, i32) {
    %c0_i32 = arith.constant 0 : i32
    %c0_i32_0 = arith.constant 0 : i32
    %c0_i32_1 = arith.constant 0 : i32
    return %c0_i32, %c0_i32_0 : i32, i32
  }
  func.func @transform_6(%arg0: i32) -> (i32, i32) {
    %c0_i32 = arith.constant 0 : i32
    %c0_i32_0 = arith.constant 0 : i32
    %c0_i32_1 = arith.constant 0 : i32
    return %c0_i32, %c0_i32_0 : i32, i32
  }
  func.func @transform_7(%arg0: i32) -> (i32, i32) {
    %c0_i32 = arith.constant 0 : i32
    %c0_i32_0 = arith.constant 0 : i32
    return %arg0, %c0_i32 : i32, i32
  }
}

</mosaic_0001>

<llo_original>
// kernel: tpu_custom_call.1
$region0: #{tpu_custom_call.1}
  #allocation0 [shape = 'u32[]', space=smem, size = 0x4, offset = 0x4, fixed_abs, tag = 'smem constant byte address 0x4 - core index']
  #allocation1 [shape = 'u32[144,128]{1,0:T(1,128)}', space=vmem, size = 0x12000, scoped, tag = 'internal scratch']
  %s0 = inlined_call_operand.vmem [shape: f32[16,32], index: 0, kind: input, shape index: {}]
  %s1 = inlined_call_operand.vmem [shape: bf16[32,256], index: 1, kind: input, shape index: {}]
  %s2 = inlined_call_operand.vmem [shape: f32[1,256], index: 2, kind: input, shape index: {}]
  %s3 = inlined_call_operand.hbm [shape: bf16[256,128], index: 3, kind: input, shape index: {}]
  %s4 = inlined_call_operand.vmem [shape: f32[1,128], index: 4, kind: input, shape index: {}]
  %s5 = inlined_call_operand.vmem [shape: bf16[128,8], index: 5, kind: input, shape index: {}]
  %s6 = inlined_call_operand.vmem [shape: f32[1,8], index: 6, kind: input, shape index: {}]
  %s7 = inlined_call_operand.vmem [shape: f32[16,8], index: 7, kind: output, shape index: {}]
  %s8 = sld [smem:[#allocation0]]
  $region42: #{tpu_custom_call.1} parent=0
    _
  %s10 = ssub.s32 1, %s8
  %s11 = scalar_select 0, %s10, %s8
  $region1: #{tpu_custom_call.1} parent=0
    #allocation2 [shape = 'u8[65536]{0}', space=vmem, size = 0x10000, scoped, tag = 'input window, operand 3, single buffered']
    #allocation3 [shape = 's32[1]{0}', space=sflag, size = 0x4, scoped, tag = 'scoped memory for tpu_custom_call.1']
    %12 = vsyncpa [#allocation3], 0
    // Predicated region
    $region2: #{tpu_custom_call.1} parent=1 // pred_check
      _
    $region3: #{tpu_custom_call.1} parent=1 // pred_check_branch
      %14 = sbr.rel (0) target = $region5
    $region4: #{tpu_custom_call.1} parent=1 // pred_region
      _
    $region5: #{tpu_custom_call.1} parent=1 // pred_fallthru
      _
    // Predicated region
    $region6: #{tpu_custom_call.1} parent=1 // pred_check
      _
    $region7: #{tpu_custom_call.1} parent=1 // pred_check_branch
      %16 = sbr.rel (0) target = $region9
    $region8: #{tpu_custom_call.1} parent=1 // pred_region
      _
    $region9: #{tpu_custom_call.1} parent=1 // pred_fallthru
      _
    // Predicated region
    $region10: #{tpu_custom_call.1} parent=1 // pred_check
      _
    $region11: #{tpu_custom_call.1} parent=1 // pred_check_branch
      %18 = sbr.rel (0) target = $region13
    $region12: #{tpu_custom_call.1} parent=1 // pred_region
      _
    $region13: #{tpu_custom_call.1} parent=1 // pred_fallthru
      _
    // Predicated region
    $region14: #{tpu_custom_call.1} parent=1 // pred_check
      _
    $region15: #{tpu_custom_call.1} parent=1 // pred_check_branch
      %20 = sbr.rel (0) target = $region17
    $region16: #{tpu_custom_call.1} parent=1 // pred_region
      %s22 = ssub.s32 2048, 2048
      %23 = vsyncadd [#allocation3], %s22
      %s24 = sshll.u32 [#allocation2], 4
      %s25 = int_to_ptr.vmem [resolvable:$true] %s24
      %30 = dma.hbm_to_vmem [thread:$0]  %s3, 2048, %s25, [#allocation3], 64, 64, 4
    $region17: #{tpu_custom_call.1} parent=1 // pred_fallthru
      _
    // Predicated region
    $region18: #{tpu_custom_call.1} parent=1 // pred_check
      _
    $region19: #{tpu_custom_call.1} parent=1 // pred_check_branch
      %32 = sbr.rel (0) target = $region21
    $region20: #{tpu_custom_call.1} parent=1 // pred_region
      _
    $region21: #{tpu_custom_call.1} parent=1 // pred_fallthru
      _
    // Predicated region
    $region22: #{tpu_custom_call.1} parent=1 // pred_check
      _
    $region23: #{tpu_custom_call.1} parent=1 // pred_check_branch
      %34 = sbr.rel (0) target = $region25
    $region24: #{tpu_custom_call.1} parent=1 // pred_region
      _
    $region25: #{tpu_custom_call.1} parent=1 // pred_fallthru
      _
    // Predicated region
    $region26: #{tpu_custom_call.1} parent=1 // pred_check
      _
    $region27: #{tpu_custom_call.1} parent=1 // pred_check_branch
      %36 = sbr.rel (0) target = $region29
    $region28: #{tpu_custom_call.1} parent=1 // pred_region
      _
    $region29: #{tpu_custom_call.1} parent=1 // pred_fallthru
      _
    // Predicated region
    $region30: #{tpu_custom_call.1} parent=1 // pred_check
      _
    $region31: #{tpu_custom_call.1} parent=1 // pred_check_branch
      %38 = sbr.rel (0) target = $region33
    $region32: #{tpu_custom_call.1} parent=1 // pred_region
      %39 = dma.done [#allocation3], 2048
    $region33: #{tpu_custom_call.1} parent=1 // pred_fallthru
      _
    %v41 = vld [vmem:[%s0] sm:$0xff]
    %v42 = vld [vmem:[%s0 + $0x8] sm:$0xff]
    %v43 = vpack.c.bf16 %v42, %v41
    %v44 = vld [vmem:[%s1] sm:$0xff]
    %v45 = vld [vmem:[%s1 + $0x8] sm:$0xff]
    %v46 = vld [vmem:[%s1 + $0x10] sm:$0xff]
    %v47 = vld [vmem:[%s1 + $0x18] sm:$0xff]
    %v48 = vld [vmem:[%s2] sm:$0x3]
    %v50 = vlaneseq
    %v51 = vshrl.u32 %v50, 7
    %v52 = vsub.s32 0, %v51
    %v53 = vrot.slane %v48, %v52
    %v54 = vlaneseq
    %v55 = vshrl.u32 %v54, 7
    %v56 = vsub.s32 1, %v55
    %v57 = vrot.slane %v48, %v56
    %v64 = vunpack.c.l.b16 %v44
    %v65 = vunpack.c.h.b16 %v44
    %v66 = vunpack.c.l.b16 %v45
    %v67 = vunpack.c.h.b16 %v45
    %v68 = vunpack.c.l.b16 %v46
    %v69 = vunpack.c.h.b16 %v46
    %v70 = vunpack.c.l.b16 %v47
    %v71 = vunpack.c.h.b16 %v47
    %v72 = vpack.c.b16 %v66, %v64
    %v73 = vpack.c.b16 %v67, %v65
    %v74 = vpack.c.b16 %v70, %v68
    %v75 = vpack.c.b16 %v71, %v69
    %vm80 = vcmask 261120
    %v82 = vsel %vm80, %v43, 0
    %84 = vmatprep.subr.bf16.mxu0 0
    %85 = vmatpush1.bf16.msra.mxu0 0
    %86 = vmatprep.subr.bf16.mxu0 0
    %87 = vmatpush1.bf16.msra.mxu0 0
    %88 = vmatprep.subr.bf16.mxu0 0
    %89 = vmatpush1.bf16.msra.mxu0 0
    %90 = vmatprep.subr.bf16.mxu0 0
    %91 = vmatpush1.bf16.msra.mxu0 0
    %92 = vmatprep.subr.bf16.mxu0 0
    %93 = vmatpush1.bf16.msra.mxu0 0
    %94 = vmatprep.subr.bf16.mxu0 0
    %95 = vmatpush1.bf16.msra.mxu0 0
    %96 = vmatprep.subr.bf16.mxu0 %v75
    %97 = vmatpush1.bf16.msra.mxu0 %v74
    %98 = vmatprep.subr.bf16.mxu0 %v73
    %99 = vmatpush1.bf16.msra.mxu0 %v72
    %100 = vmatprep.subr.bf16.mxu0 0
    %101 = vmatpush2.bf16.msra.mxu0 0
    %102 = vmatprep.subr.bf16.mxu0 0
    %103 = vmatpush2.bf16.msra.mxu0 0
    %104 = vmatprep.subr.bf16.mxu0 0
    %105 = vmatpush2.bf16.msra.mxu0 0
    %106 = vmatprep.subr.bf16.mxu0 0
    %107 = vmatpush2.bf16.msra.mxu0 0
    %108 = vmatprep.subr.bf16.mxu0 0
    %109 = vmatpush2.bf16.msra.mxu0 0
    %110 = vmatprep.subr.bf16.mxu0 0
    %111 = vmatpush2.bf16.msra.mxu0 0
    %112 = vmatprep.subr.bf16.mxu0 0
    %113 = vmatpush2.bf16.msra.mxu0 0
    %114 = vmatprep.subr.bf16.mxu0 0
    %115 = vmatpush2.bf16.msra.mxu0 0
    %116 = vmatprep.mubr.bf16.mxu0 0
    %117 = vmatmul.mubr.bf16.gmra.mxu0 %v82
    %v118 = vpop.f32.mrf.mxu0
    %v119 = vadd.f32 %v53, %v118
    %v120 = vpop.f32.mrf.mxu0
    %v121 = vadd.f32 %v57, %v120
    %v122 = vpop.f32.mrf.mxu0
    %v123 = vadd.f32 %v53, %v122
    %v124 = vpop.f32.mrf.mxu0
    %v125 = vadd.f32 %v57, %v124
    %126 = vdwg.mxu0
    %v127 = vmul.f32 %v119, 0.1
    %v128 = vmul.f32 %v121, 0.1
    %v129 = vmul.f32 %v123, 0.1
    %v130 = vmul.f32 %v125, 0.1
    %v131 = vmax.f32 %v119, %v127
    %v132 = vmax.f32 %v121, %v128
    %v133 = vmax.f32 %v123, %v129
    %v134 = vmax.f32 %v125, %v130
    %v135 = vpack.c.bf16 %v133, %v131
    %v136 = vpack.c.bf16 %v134, %v132
    %v137 = vld [vmem:[#allocation2] sm:$0xf]
    %v138 = vld [vmem:[#allocation2 + $0x4] sm:$0xf]
    %v139 = vld [vmem:[#allocation2 + $0x8] sm:$0xf]
    %v140 = vld [vmem:[#allocation2 + $0xc] sm:$0xf]
    %v141 = vld [vmem:[#allocation2 + $0x10] sm:$0xf]
    %v142 = vld [vmem:[#allocation2 + $0x14] sm:$0xf]
    %v143 = vld [vmem:[#allocation2 + $0x18] sm:$0xf]
    %v144 = vld [vmem:[#allocation2 + $0x1c] sm:$0xf]
    %v145 = vld [vmem:[#allocation2 + $0x20] sm:$0xf]
    %v146 = vld [vmem:[#allocation2 + $0x24] sm:$0xf]
    %v147 = vld [vmem:[#allocation2 + $0x28] sm:$0xf]
    %v148 = vld [vmem:[#allocation2 + $0x2c] sm:$0xf]
    %v149 = vld [vmem:[#allocation2 + $0x30] sm:$0xf]
    %v150 = vld [vmem:[#allocation2 + $0x34] sm:$0xf]
    %v151 = vld [vmem:[#allocation2 + $0x38] sm:$0xf]
    %v152 = vld [vmem:[#allocation2 + $0x3c] sm:$0xf]
    %v153 = vld [vmem:[#allocation2 + $0x40] sm:$0xf]
    %v154 = vld [vmem:[#allocation2 + $0x44] sm:$0xf]
    %v155 = vld [vmem:[#allocation2 + $0x48] sm:$0xf]
    %v156 = vld [vmem:[#allocation2 + $0x4c] sm:$0xf]
    %v157 = vld [vmem:[#allocation2 + $0x50] sm:$0xf]
    %v158 = vld [vmem:[#allocation2 + $0x54] sm:$0xf]
    %v159 = vld [vmem:[#allocation2 + $0x58] sm:$0xf]
    %v160 = vld [vmem:[#allocation2 + $0x5c] sm:$0xf]
    %v161 = vld [vmem:[#allocation2 + $0x60] sm:$0xf]
    %v162 = vld [vmem:[#allocation2 + $0x64] sm:$0xf]
    %v163 = vld [vmem:[#allocation2 + $0x68] sm:$0xf]
    %v164 = vld [vmem:[#allocation2 + $0x6c] sm:$0xf]
    %v165 = vld [vmem:[#allocation2 + $0x70] sm:$0xf]
    %v166 = vld [vmem:[#allocation2 + $0x74] sm:$0xf]
    %v167 = vld [vmem:[#allocation2 + $0x78] sm:$0xf]
    %v168 = vld [vmem:[#allocation2 + $0x7c] sm:$0xf]
    %v169 = vld [vmem:[%s4] sm:$0x1]
    %v171 = vlaneseq
    %v172 = vshrl.u32 %v171, 7
    %v173 = vsub.s32 0, %v172
    %v174 = vrot.slane %v169, %v173
    %v208 = vunpack.c.l.b16 %v137
    %v209 = vunpack.c.l.b16 %v138
    %v210 = vunpack.c.l.b16 %v139
    %v211 = vunpack.c.l.b16 %v140
    %v212 = vunpack.c.l.b16 %v141
    %v213 = vunpack.c.l.b16 %v142
    %v214 = vunpack.c.l.b16 %v143
    %v215 = vunpack.c.l.b16 %v144
    %v216 = vunpack.c.l.b16 %v145
    %v217 = vunpack.c.l.b16 %v146
    %v218 = vunpack.c.l.b16 %v147
    %v219 = vunpack.c.l.b16 %v148
    %v220 = vunpack.c.l.b16 %v149
    %v221 = vunpack.c.l.b16 %v150
    %v222 = vunpack.c.l.b16 %v151
    %v223 = vunpack.c.l.b16 %v152
    %v224 = vunpack.c.l.b16 %v153
    %v225 = vunpack.c.l.b16 %v154
    %v226 = vunpack.c.l.b16 %v155
    %v227 = vunpack.c.l.b16 %v156
    %v228 = vunpack.c.l.b16 %v157
    %v229 = vunpack.c.l.b16 %v158
    %v230 = vunpack.c.l.b16 %v159
    %v231 = vunpack.c.l.b16 %v160
    %v232 = vunpack.c.l.b16 %v161
    %v233 = vunpack.c.l.b16 %v162
    %v234 = vunpack.c.l.b16 %v163
    %v235 = vunpack.c.l.b16 %v164
    %v236 = vunpack.c.l.b16 %v165
    %v237 = vunpack.c.l.b16 %v166
    %v238 = vunpack.c.l.b16 %v167
    %v239 = vunpack.c.l.b16 %v168
    %v240 = vpack.c.b16 %v209, %v208
    %v241 = vpack.c.b16 %v211, %v210
    %v242 = vpack.c.b16 %v213, %v212
    %v243 = vpack.c.b16 %v215, %v214
    %v244 = vpack.c.b16 %v217, %v216
    %v245 = vpack.c.b16 %v219, %v218
    %v246 = vpack.c.b16 %v221, %v220
    %v247 = vpack.c.b16 %v223, %v222
    %v248 = vpack.c.b16 %v225, %v224
    %v249 = vpack.c.b16 %v227, %v226
    %v250 = vpack.c.b16 %v229, %v228
    %v251 = vpack.c.b16 %v231, %v230
    %v252 = vpack.c.b16 %v233, %v232
    %v253 = vpack.c.b16 %v235, %v234
    %v254 = vpack.c.b16 %v237, %v236
    %v255 = vpack.c.b16 %v239, %v238
    %272 = vmatprep.subr.bf16.mxu0 0
    %273 = vmatpush1.bf16.msra.mxu0 %v247
    %274 = vmatprep.subr.bf16.mxu0 0
    %275 = vmatpush1.bf16.msra.mxu0 %v246
    %276 = vmatprep.subr.bf16.mxu0 0
    %277 = vmatpush1.bf16.msra.mxu0 %v245
    %278 = vmatprep.subr.bf16.mxu0 0
    %279 = vmatpush1.bf16.msra.mxu0 %v244
    %280 = vmatprep.subr.bf16.mxu0 0
    %281 = vmatpush1.bf16.msra.mxu0 %v243
    %282 = vmatprep.subr.bf16.mxu0 0
    %283 = vmatpush1.bf16.msra.mxu0 %v242
    %284 = vmatprep.subr.bf16.mxu0 0
    %285 = vmatpush1.bf16.msra.mxu0 %v241
    %286 = vmatprep.subr.bf16.mxu0 0
    %287 = vmatpush1.bf16.msra.mxu0 %v240
    %288 = vmatprep.subr.bf16.mxu0 0
    %289 = vmatpush2.bf16.msra.mxu0 %v255
    %290 = vmatprep.subr.bf16.mxu0 0
    %291 = vmatpush2.bf16.msra.mxu0 %v254
    %292 = vmatprep.subr.bf16.mxu0 0
    %293 = vmatpush2.bf16.msra.mxu0 %v253
    %294 = vmatprep.subr.bf16.mxu0 0
    %295 = vmatpush2.bf16.msra.mxu0 %v252
    %296 = vmatprep.subr.bf16.mxu0 0
    %297 = vmatpush2.bf16.msra.mxu0 %v251
    %298 = vmatprep.subr.bf16.mxu0 0
    %299 = vmatpush2.bf16.msra.mxu0 %v250
    %300 = vmatprep.subr.bf16.mxu0 0
    %301 = vmatpush2.bf16.msra.mxu0 %v249
    %302 = vmatprep.subr.bf16.mxu0 0
    %303 = vmatpush2.bf16.msra.mxu0 %v248
    %304 = vmatprep.mubr.bf16.mxu0 %v136
    %305 = vmatmul.mubr.bf16.gmra.mxu0 %v135
    %v306 = vpop.f32.mrf.mxu0
    %v307 = vadd.f32 %v174, %v306
    %v308 = vpop.f32.mrf.mxu0
    %v309 = vpop.f32.mrf.mxu0
    %v310 = vadd.f32 %v174, %v309
    %v311 = vpop.f32.mrf.mxu0
    %312 = vdwg.mxu0
    %v313 = vmul.f32 %v307, 0.1
    %v314 = vmul.f32 %v310, 0.1
    %v315 = vmax.f32 %v307, %v313
    %v316 = vmax.f32 %v310, %v314
    %v317 = vpack.c.bf16 %v316, %v315
    %v318 = vld [vmem:[%s5] sm:$0xf]
    %v319 = vld [vmem:[%s5 + $0x4] sm:$0xf]
    %v320 = vld [vmem:[%s5 + $0x8] sm:$0xf]
    %v321 = vld [vmem:[%s5 + $0xc] sm:$0xf]
    %v322 = vld [vmem:[%s5 + $0x10] sm:$0xf]
    %v323 = vld [vmem:[%s5 + $0x14] sm:$0xf]
    %v324 = vld [vmem:[%s5 + $0x18] sm:$0xf]
    %v325 = vld [vmem:[%s5 + $0x1c] sm:$0xf]
    %v326 = vld [vmem:[%s5 + $0x20] sm:$0xf]
    %v327 = vld [vmem:[%s5 + $0x24] sm:$0xf]
    %v328 = vld [vmem:[%s5 + $0x28] sm:$0xf]
    %v329 = vld [vmem:[%s5 + $0x2c] sm:$0xf]
    %v330 = vld [vmem:[%s5 + $0x30] sm:$0xf]
    %v331 = vld [vmem:[%s5 + $0x34] sm:$0xf]
    %v332 = vld [vmem:[%s5 + $0x38] sm:$0xf]
    %v333 = vld [vmem:[%s5 + $0x3c] sm:$0xf]
    %v334 = vld [vmem:[%s6] sm:$0x1]
    %v336 = vlaneseq
    %v337 = vshrl.u32 %v336, 7
    %v338 = vsub.s32 0, %v337
    %v339 = vrot.slane %v334, %v338
    %v357 = vunpack.c.l.b16 %v318
    %v358 = vunpack.c.l.b16 %v319
    %v359 = vunpack.c.l.b16 %v320
    %v360 = vunpack.c.l.b16 %v321
    %v361 = vunpack.c.l.b16 %v322
    %v362 = vunpack.c.l.b16 %v323
    %v363 = vunpack.c.l.b16 %v324
    %v364 = vunpack.c.l.b16 %v325
    %v365 = vunpack.c.l.b16 %v326
    %v366 = vunpack.c.l.b16 %v327
    %v367 = vunpack.c.l.b16 %v328
    %v368 = vunpack.c.l.b16 %v329
    %v369 = vunpack.c.l.b16 %v330
    %v370 = vunpack.c.l.b16 %v331
    %v371 = vunpack.c.l.b16 %v332
    %v372 = vunpack.c.l.b16 %v333
    %v373 = vpack.c.b16 %v358, %v357
    %v374 = vpack.c.b16 %v360, %v359
    %v375 = vpack.c.b16 %v362, %v361
    %v376 = vpack.c.b16 %v364, %v363
    %v377 = vpack.c.b16 %v366, %v365
    %v378 = vpack.c.b16 %v368, %v367
    %v379 = vpack.c.b16 %v370, %v369
    %v380 = vpack.c.b16 %v372, %v371
    %389 = vmatprep.subr.bf16.mxu0 0
    %390 = vmatpush1.bf16.msra.mxu0 %v380
    %391 = vmatprep.subr.bf16.mxu0 0
    %392 = vmatpush1.bf16.msra.mxu0 %v379
    %393 = vmatprep.subr.bf16.mxu0 0
    %394 = vmatpush1.bf16.msra.mxu0 %v378
    %395 = vmatprep.subr.bf16.mxu0 0
    %396 = vmatpush1.bf16.msra.mxu0 %v377
    %397 = vmatprep.subr.bf16.mxu0 0
    %398 = vmatpush1.bf16.msra.mxu0 %v376
    %399 = vmatprep.subr.bf16.mxu0 0
    %400 = vmatpush1.bf16.msra.mxu0 %v375
    %401 = vmatprep.subr.bf16.mxu0 0
    %402 = vmatpush1.bf16.msra.mxu0 %v374
    %403 = vmatprep.subr.bf16.mxu0 0
    %404 = vmatpush1.bf16.msra.mxu0 %v373
    %405 = vmatprep.subr.bf16.mxu0 0
    %406 = vmatpush2.bf16.msra.mxu0 0
    %407 = vmatprep.subr.bf16.mxu0 0
    %408 = vmatpush2.bf16.msra.mxu0 0
    %409 = vmatprep.subr.bf16.mxu0 0
    %410 = vmatpush2.bf16.msra.mxu0 0
    %411 = vmatprep.subr.bf16.mxu0 0
    %412 = vmatpush2.bf16.msra.mxu0 0
    %413 = vmatprep.subr.bf16.mxu0 0
    %414 = vmatpush2.bf16.msra.mxu0 0
    %415 = vmatprep.subr.bf16.mxu0 0
    %416 = vmatpush2.bf16.msra.mxu0 0
    %417 = vmatprep.subr.bf16.mxu0 0
    %418 = vmatpush2.bf16.msra.mxu0 0
    %419 = vmatprep.subr.bf16.mxu0 0
    %420 = vmatpush2.bf16.msra.mxu0 0
    %421 = vmatprep.mubr.bf16.mxu0 0
    %422 = vmatmul.mubr.bf16.gmra.mxu0 %v317
    %v423 = vpop.f32.mrf.mxu0
    %v424 = vadd.f32 %v339, %v423
    %v425 = vpop.f32.mrf.mxu0
    %v426 = vpop.f32.mrf.mxu0
    %v427 = vadd.f32 %v339, %v426
    %v428 = vpop.f32.mrf.mxu0
    %429 = vdwg.mxu0
    %vm430 = vcmask 64512
    %431 = vst.msk [vmem:[%s7] sm:$0xff] %vm430, %v424
    %432 = vst.msk [vmem:[%s7 + $0x8] sm:$0xff] %vm430, %v427
    // Predicated region
    $region34: #{tpu_custom_call.1} parent=1 // pred_check
      _
    $region35: #{tpu_custom_call.1} parent=1 // pred_check_branch
      %434 = sbr.rel (0) target = $region37
    $region36: #{tpu_custom_call.1} parent=1 // pred_region
      _
    $region37: #{tpu_custom_call.1} parent=1 // pred_fallthru
      _
    // Predicated region
    $region38: #{tpu_custom_call.1} parent=1 // pred_check
      _
    $region39: #{tpu_custom_call.1} parent=1 // pred_check_branch
      %436 = sbr.rel (0) target = $region41
    $region40: #{tpu_custom_call.1} parent=1 // pred_region
      _
    $region41: #{tpu_custom_call.1} parent=1 // pred_fallthru
      _
    %437 = vsyncpa [#allocation3], 1

// kernel: tpu_custom_call.1
$region0: #{tpu_custom_call.1}
  #allocation0 [shape = 'u32[]', space=smem, size = 0x4, offset = 0x4, fixed_abs, tag = 'smem constant byte address 0x4 - core index']
  #allocation1 [shape = 'u32[144,128]{1,0:T(1,128)}', space=vmem, size = 0x12000, scoped, tag = 'internal scratch']
  %s0 = inlined_call_operand.vmem [shape: f32[16,32], index: 0, kind: input, shape index: {}]
  %s1 = inlined_call_operand.vmem [shape: bf16[32,256], index: 1, kind: input, shape index: {}]
  %s2 = inlined_call_operand.vmem [shape: f32[1,256], index: 2, kind: input, shape index: {}]
  %s3 = inlined_call_operand.hbm [shape: bf16[256,128], index: 3, kind: input, shape index: {}]
  %s4 = inlined_call_operand.vmem [shape: f32[1,128], index: 4, kind: input, shape index: {}]
  %s5 = inlined_call_operand.vmem [shape: bf16[128,8], index: 5, kind: input, shape index: {}]
  %s6 = inlined_call_operand.vmem [shape: f32[1,8], index: 6, kind: input, shape index: {}]
  %s7 = inlined_call_operand.vmem [shape: f32[16,8], index: 7, kind: output, shape index: {}]
  %s8 = sld [smem:[#allocation0]]
  $region42: #{tpu_custom_call.1} parent=0
    _
  %s10 = ssub.s32 1, %s8
  %s11 = scalar_select 0, %s10, %s8
  $region1: #{tpu_custom_call.1} parent=0
    #allocation2 [shape = 'u8[65536]{0}', space=vmem, size = 0x10000, scoped, tag = 'input window, operand 3, single buffered']
    #allocation3 [shape = 's32[1]{0}', space=sflag, size = 0x4, scoped, tag = 'scoped memory for tpu_custom_call.1']
    %12 = vsyncpa [#allocation3], 0
    // Predicated region
    $region2: #{tpu_custom_call.1} parent=1 // pred_check
      _
    $region3: #{tpu_custom_call.1} parent=1 // pred_check_branch
      %14 = sbr.rel (0) target = $region5
    $region4: #{tpu_custom_call.1} parent=1 // pred_region
      _
    $region5: #{tpu_custom_call.1} parent=1 // pred_fallthru
      _
    // Predicated region
    $region6: #{tpu_custom_call.1} parent=1 // pred_check
      _
    $region7: #{tpu_custom_call.1} parent=1 // pred_check_branch
      %16 = sbr.rel (0) target = $region9
    $region8: #{tpu_custom_call.1} parent=1 // pred_region
      _
    $region9: #{tpu_custom_call.1} parent=1 // pred_fallthru
      _
    // Predicated region
    $region10: #{tpu_custom_call.1} parent=1 // pred_check
      _
    $region11: #{tpu_custom_call.1} parent=1 // pred_check_branch
      %18 = sbr.rel (0) target = $region13
    $region12: #{tpu_custom_call.1} parent=1 // pred_region
      _
    $region13: #{tpu_custom_call.1} parent=1 // pred_fallthru
      _
    // Predicated region
    $region14: #{tpu_custom_call.1} parent=1 // pred_check
      _
    $region15: #{tpu_custom_call.1} parent=1 // pred_check_branch
      %20 = sbr.rel (0) target = $region17
    $region16: #{tpu_custom_call.1} parent=1 // pred_region
      %s22 = ssub.s32 2048, 2048
      %23 = vsyncadd [#allocation3], %s22
      %s24 = sshll.u32 [#allocation2], 4
      %s25 = int_to_ptr.vmem [resolvable:$true] %s24
      %30 = dma.hbm_to_vmem [thread:$0]  %s3, 2048, %s25, [#allocation3], 64, 64, 4
    $region17: #{tpu_custom_call.1} parent=1 // pred_fallthru
      _
    // Predicated region
    $region18: #{tpu_custom_call.1} parent=1 // pred_check
      _
    $region19: #{tpu_custom_call.1} parent=1 // pred_check_branch
      %32 = sbr.rel (0) target = $region21
    $region20: #{tpu_custom_call.1} parent=1 // pred_region
      _
    $region21: #{tpu_custom_call.1} parent=1 // pred_fallthru
      _
    // Predicated region
    $region22: #{tpu_custom_call.1} parent=1 // pred_check
      _
    $region23: #{tpu_custom_call.1} parent=1 // pred_check_branch
      %34 = sbr.rel (0) target = $region25
    $region24: #{tpu_custom_call.1} parent=1 // pred_region
      _
    $region25: #{tpu_custom_call.1} parent=1 // pred_fallthru
      _
    // Predicated region
    $region26: #{tpu_custom_call.1} parent=1 // pred_check
      _
    $region27: #{tpu_custom_call.1} parent=1 // pred_check_branch
      %36 = sbr.rel (0) target = $region29
    $region28: #{tpu_custom_call.1} parent=1 // pred_region
      _
    $region29: #{tpu_custom_call.1} parent=1 // pred_fallthru
      _
    // Predicated region
    $region30: #{tpu_custom_call.1} parent=1 // pred_check
      _
    $region31: #{tpu_custom_call.1} parent=1 // pred_check_branch
      %38 = sbr.rel (0) target = $region33
    $region32: #{tpu_custom_call.1} parent=1 // pred_region
      %39 = dma.done [#allocation3], 2048
    $region33: #{tpu_custom_call.1} parent=1 // pred_fallthru
      _
    %v41 = vld [vmem:[%s0] sm:$0xff]
    %v42 = vld [vmem:[%s0 + $0x8] sm:$0xff]
    %v43 = vpack.c.bf16 %v42, %v41
    %v44 = vld [vmem:[%s1] sm:$0xff]
    %v45 = vld [vmem:[%s1 + $0x8] sm:$0xff]
    %v46 = vld [vmem:[%s1 + $0x10] sm:$0xff]
    %v47 = vld [vmem:[%s1 + $0x18] sm:$0xff]
    %v48 = vld [vmem:[%s2] sm:$0x3]
    %v50 = vlaneseq
    %v51 = vshrl.u32 %v50, 7
    %v52 = vsub.s32 0, %v51
    %v53 = vrot.slane %v48, %v52
    %v54 = vlaneseq
    %v55 = vshrl.u32 %v54, 7
    %v56 = vsub.s32 1, %v55
    %v57 = vrot.slane %v48, %v56
    %v64 = vunpack.c.l.b16 %v44
    %v65 = vunpack.c.h.b16 %v44
    %v66 = vunpack.c.l.b16 %v45
    %v67 = vunpack.c.h.b16 %v45
    %v68 = vunpack.c.l.b16 %v46
    %v69 = vunpack.c.h.b16 %v46
    %v70 = vunpack.c.l.b16 %v47
    %v71 = vunpack.c.h.b16 %v47
    %v72 = vpack.c.b16 %v66, %v64
    %v73 = vpack.c.b16 %v67, %v65
    %v74 = vpack.c.b16 %v70, %v68
    %v75 = vpack.c.b16 %v71, %v69
    %vm80 = vcmask 261120
    %v82 = vsel %vm80, %v43, 0
    %84 = vmatprep.subr.bf16.mxu0 0
    %85 = vmatpush1.bf16.msra.mxu0 0
    %86 = vmatprep.subr.bf16.mxu0 0
    %87 = vmatpush1.bf16.msra.mxu0 0
    %88 = vmatprep.subr.bf16.mxu0 0
    %89 = vmatpush1.bf16.msra.mxu0 0
    %90 = vmatprep.subr.bf16.mxu0 0
    %91 = vmatpush1.bf16.msra.mxu0 0
    %92 = vmatprep.subr.bf16.mxu0 0
    %93 = vmatpush1.bf16.msra.mxu0 0
    %94 = vmatprep.subr.bf16.mxu0 0
    %95 = vmatpush1.bf16.msra.mxu0 0
    %96 = vmatprep.subr.bf16.mxu0 %v75
    %97 = vmatpush1.bf16.msra.mxu0 %v74
    %98 = vmatprep.subr.bf16.mxu0 %v73
    %99 = vmatpush1.bf16.msra.mxu0 %v72
    %100 = vmatprep.subr.bf16.mxu0 0
    %101 = vmatpush2.bf16.msra.mxu0 0
    %102 = vmatprep.subr.bf16.mxu0 0
    %103 = vmatpush2.bf16.msra.mxu0 0
    %104 = vmatprep.subr.bf16.mxu0 0
    %105 = vmatpush2.bf16.msra.mxu0 0
    %106 = vmatprep.subr.bf16.mxu0 0
    %107 = vmatpush2.bf16.msra.mxu0 0
    %108 = vmatprep.subr.bf16.mxu0 0
    %109 = vmatpush2.bf16.msra.mxu0 0
    %110 = vmatprep.subr.bf16.mxu0 0
    %111 = vmatpush2.bf16.msra.mxu0 0
    %112 = vmatprep.subr.bf16.mxu0 0
    %113 = vmatpush2.bf16.msra.mxu0 0
    %114 = vmatprep.subr.bf16.mxu0 0
    %115 = vmatpush2.bf16.msra.mxu0 0
    %116 = vmatprep.mubr.bf16.mxu0 0
    %117 = vmatmul.mubr.bf16.gmra.mxu0 %v82
    %v118 = vpop.f32.mrf.mxu0
    %v119 = vadd.f32 %v53, %v118
    %v120 = vpop.f32.mrf.mxu0
    %v121 = vadd.f32 %v57, %v120
    %v122 = vpop.f32.mrf.mxu0
    %v123 = vadd.f32 %v53, %v122
    %v124 = vpop.f32.mrf.mxu0
    %v125 = vadd.f32 %v57, %v124
    %126 = vdwg.mxu0
    %v127 = vmul.f32 %v119, 0.1
    %v128 = vmul.f32 %v121, 0.1
    %v129 = vmul.f32 %v123, 0.1
    %v130 = vmul.f32 %v125, 0.1
    %v131 = vmax.f32 %v119, %v127
    %v132 = vmax.f32 %v121, %v128
    %v133 = vmax.f32 %v123, %v129
    %v134 = vmax.f32 %v125, %v130
    %v135 = vpack.c.bf16 %v133, %v131
    %v136 = vpack.c.bf16 %v134, %v132
    %v137 = vld [vmem:[#allocation2] sm:$0xf]
    %v138 = vld [vmem:[#allocation2 + $0x4] sm:$0xf]
    %v139 = vld [vmem:[#allocation2 + $0x8] sm:$0xf]
    %v140 = vld [vmem:[#allocation2 + $0xc] sm:$0xf]
    %v141 = vld [vmem:[#allocation2 + $0x10] sm:$0xf]
    %v142 = vld [vmem:[#allocation2 + $0x14] sm:$0xf]
    %v143 = vld [vmem:[#allocation2 + $0x18] sm:$0xf]
    %v144 = vld [vmem:[#allocation2 + $0x1c] sm:$0xf]
    %v145 = vld [vmem:[#allocation2 + $0x20] sm:$0xf]
    %v146 = vld [vmem:[#allocation2 + $0x24] sm:$0xf]
    %v147 = vld [vmem:[#allocation2 + $0x28] sm:$0xf]
    %v148 = vld [vmem:[#allocation2 + $0x2c] sm:$0xf]
    %v149 = vld [vmem:[#allocation2 + $0x30] sm:$0xf]
    %v150 = vld [vmem:[#allocation2 + $0x34] sm:$0xf]
    %v151 = vld [vmem:[#allocation2 + $0x38] sm:$0xf]
    %v152 = vld [vmem:[#allocation2 + $0x3c] sm:$0xf]
    %v153 = vld [vmem:[#allocation2 + $0x40] sm:$0xf]
    %v154 = vld [vmem:[#allocation2 + $0x44] sm:$0xf]
    %v155 = vld [vmem:[#allocation2 + $0x48] sm:$0xf]
    %v156 = vld [vmem:[#allocation2 + $0x4c] sm:$0xf]
    %v157 = vld [vmem:[#allocation2 + $0x50] sm:$0xf]
    %v158 = vld [vmem:[#allocation2 + $0x54] sm:$0xf]
    %v159 = vld [vmem:[#allocation2 + $0x58] sm:$0xf]
    %v160 = vld [vmem:[#allocation2 + $0x5c] sm:$0xf]
    %v161 = vld [vmem:[#allocation2 + $0x60] sm:$0xf]
    %v162 = vld [vmem:[#allocation2 + $0x64] sm:$0xf]
    %v163 = vld [vmem:[#allocation2 + $0x68] sm:$0xf]
    %v164 = vld [vmem:[#allocation2 + $0x6c] sm:$0xf]
    %v165 = vld [vmem:[#allocation2 + $0x70] sm:$0xf]
    %v166 = vld [vmem:[#allocation2 + $0x74] sm:$0xf]
    %v167 = vld [vmem:[#allocation2 + $0x78] sm:$0xf]
    %v168 = vld [vmem:[#allocation2 + $0x7c] sm:$0xf]
    %v169 = vld [vmem:[%s4] sm:$0x1]
    %v171 = vlaneseq
    %v172 = vshrl.u32 %v171, 7
    %v173 = vsub.s32 0, %v172
    %v174 = vrot.slane %v169, %v173
    %v208 = vunpack.c.l.b16 %v137
    %v209 = vunpack.c.l.b16 %v138
    %v210 = vunpack.c.l.b16 %v139
    %v211 = vunpack.c.l.b16 %v140
    %v212 = vunpack.c.l.b16 %v141
    %v213 = vunpack.c.l.b16 %v142
    %v214 = vunpack.c.l.b16 %v143
    %v215 = vunpack.c.l.b16 %v144
    %v216 = vunpack.c.l.b16 %v145
    %v217 = vunpack.c.l.b16 %v146
    %v218 = vunpack.c.l.b16 %v147
    %v219 = vunpack.c.l.b16 %v148
    %v220 = vunpack.c.l.b16 %v149
    %v221 = vunpack.c.l.b16 %v150
    %v222 = vunpack.c.l.b16 %v151
    %v223 = vunpack.c.l.b16 %v152
    %v224 = vunpack.c.l.b16 %v153
    %v225 = vunpack.c.l.b16 %v154
    %v226 = vunpack.c.l.b16 %v155
    %v227 = vunpack.c.l.b16 %v156
    %v228 = vunpack.c.l.b16 %v157
    %v229 = vunpack.c.l.b16 %v158
    %v230 = vunpack.c.l.b16 %v159
    %v231 = vunpack.c.l.b16 %v160
    %v232 = vunpack.c.l.b16 %v161
    %v233 = vunpack.c.l.b16 %v162
    %v234 = vunpack.c.l.b16 %v163
    %v235 = vunpack.c.l.b16 %v164
    %v236 = vunpack.c.l.b16 %v165
    %v237 = vunpack.c.l.b16 %v166
    %v238 = vunpack.c.l.b16 %v167
    %v239 = vunpack.c.l.b16 %v168
    %v240 = vpack.c.b16 %v209, %v208
    %v241 = vpack.c.b16 %v211, %v210
    %v242 = vpack.c.b16 %v213, %v212
    %v243 = vpack.c.b16 %v215, %v214
    %v244 = vpack.c.b16 %v217, %v216
    %v245 = vpack.c.b16 %v219, %v218
    %v246 = vpack.c.b16 %v221, %v220
    %v247 = vpack.c.b16 %v223, %v222
    %v248 = vpack.c.b16 %v225, %v224
    %v249 = vpack.c.b16 %v227, %v226
    %v250 = vpack.c.b16 %v229, %v228
    %v251 = vpack.c.b16 %v231, %v230
    %v252 = vpack.c.b16 %v233, %v232
    %v253 = vpack.c.b16 %v235, %v234
    %v254 = vpack.c.b16 %v237, %v236
    %v255 = vpack.c.b16 %v239, %v238
    %272 = vmatprep.subr.bf16.mxu0 0
    %273 = vmatpush1.bf16.msra.mxu0 %v247
    %274 = vmatprep.subr.bf16.mxu0 0
    %275 = vmatpush1.bf16.msra.mxu0 %v246
    %276 = vmatprep.subr.bf16.mxu0 0
    %277 = vmatpush1.bf16.msra.mxu0 %v245
    %278 = vmatprep.subr.bf16.mxu0 0
    %279 = vmatpush1.bf16.msra.mxu0 %v244
    %280 = vmatprep.subr.bf16.mxu0 0
    %281 = vmatpush1.bf16.msra.mxu0 %v243
    %282 = vmatprep.subr.bf16.mxu0 0
    %283 = vmatpush1.bf16.msra.mxu0 %v242
    %284 = vmatprep.subr.bf16.mxu0 0
    %285 = vmatpush1.bf16.msra.mxu0 %v241
    %286 = vmatprep.subr.bf16.mxu0 0
    %287 = vmatpush1.bf16.msra.mxu0 %v240
    %288 = vmatprep.subr.bf16.mxu0 0
    %289 = vmatpush2.bf16.msra.mxu0 %v255
    %290 = vmatprep.subr.bf16.mxu0 0
    %291 = vmatpush2.bf16.msra.mxu0 %v254
    %292 = vmatprep.subr.bf16.mxu0 0
    %293 = vmatpush2.bf16.msra.mxu0 %v253
    %294 = vmatprep.subr.bf16.mxu0 0
    %295 = vmatpush2.bf16.msra.mxu0 %v252
    %296 = vmatprep.subr.bf16.mxu0 0
    %297 = vmatpush2.bf16.msra.mxu0 %v251
    %298 = vmatprep.subr.bf16.mxu0 0
    %299 = vmatpush2.bf16.msra.mxu0 %v250
    %300 = vmatprep.subr.bf16.mxu0 0
    %301 = vmatpush2.bf16.msra.mxu0 %v249
    %302 = vmatprep.subr.bf16.mxu0 0
    %303 = vmatpush2.bf16.msra.mxu0 %v248
    %304 = vmatprep.mubr.bf16.mxu0 %v136
    %305 = vmatmul.mubr.bf16.gmra.mxu0 %v135
    %v306 = vpop.f32.mrf.mxu0
    %v307 = vadd.f32 %v174, %v306
    %v308 = vpop.f32.mrf.mxu0
    %v309 = vpop.f32.mrf.mxu0
    %v310 = vadd.f32 %v174, %v309
    %v311 = vpop.f32.mrf.mxu0
    %312 = vdwg.mxu0
    %v313 = vmul.f32 %v307, 0.1
    %v314 = vmul.f32 %v310, 0.1
    %v315 = vmax.f32 %v307, %v313
    %v316 = vmax.f32 %v310, %v314
    %v317 = vpack.c.bf16 %v316, %v315
    %v318 = vld [vmem:[%s5] sm:$0xf]
    %v319 = vld [vmem:[%s5 + $0x4] sm:$0xf]
    %v320 = vld [vmem:[%s5 + $0x8] sm:$0xf]
    %v321 = vld [vmem:[%s5 + $0xc] sm:$0xf]
    %v322 = vld [vmem:[%s5 + $0x10] sm:$0xf]
    %v323 = vld [vmem:[%s5 + $0x14] sm:$0xf]
    %v324 = vld [vmem:[%s5 + $0x18] sm:$0xf]
    %v325 = vld [vmem:[%s5 + $0x1c] sm:$0xf]
    %v326 = vld [vmem:[%s5 + $0x20] sm:$0xf]
    %v327 = vld [vmem:[%s5 + $0x24] sm:$0xf]
    %v328 = vld [vmem:[%s5 + $0x28] sm:$0xf]
    %v329 = vld [vmem:[%s5 + $0x2c] sm:$0xf]
    %v330 = vld [vmem:[%s5 + $0x30] sm:$0xf]
    %v331 = vld [vmem:[%s5 + $0x34] sm:$0xf]
    %v332 = vld [vmem:[%s5 + $0x38] sm:$0xf]
    %v333 = vld [vmem:[%s5 + $0x3c] sm:$0xf]
    %v334 = vld [vmem:[%s6] sm:$0x1]
    %v336 = vlaneseq
    %v337 = vshrl.u32 %v336, 7
    %v338 = vsub.s32 0, %v337
    %v339 = vrot.slane %v334, %v338
    %v357 = vunpack.c.l.b16 %v318
    %v358 = vunpack.c.l.b16 %v319
    %v359 = vunpack.c.l.b16 %v320
    %v360 = vunpack.c.l.b16 %v321
    %v361 = vunpack.c.l.b16 %v322
    %v362 = vunpack.c.l.b16 %v323
    %v363 = vunpack.c.l.b16 %v324
    %v364 = vunpack.c.l.b16 %v325
    %v365 = vunpack.c.l.b16 %v326
    %v366 = vunpack.c.l.b16 %v327
    %v367 = vunpack.c.l.b16 %v328
    %v368 = vunpack.c.l.b16 %v329
    %v369 = vunpack.c.l.b16 %v330
    %v370 = vunpack.c.l.b16 %v331
    %v371 = vunpack.c.l.b16 %v332
    %v372 = vunpack.c.l.b16 %v333
    %v373 = vpack.c.b16 %v358, %v357
    %v374 = vpack.c.b16 %v360, %v359
    %v375 = vpack.c.b16 %v362, %v361
    %v376 = vpack.c.b16 %v364, %v363
    %v377 = vpack.c.b16 %v366, %v365
    %v378 = vpack.c.b16 %v368, %v367
    %v379 = vpack.c.b16 %v370, %v369
    %v380 = vpack.c.b16 %v372, %v371
    %389 = vmatprep.subr.bf16.mxu0 0
    %390 = vmatpush1.bf16.msra.mxu0 %v380
    %391 = vmatprep.subr.bf16.mxu0 0
    %392 = vmatpush1.bf16.msra.mxu0 %v379
    %393 = vmatprep.subr.bf16.mxu0 0
    %394 = vmatpush1.bf16.msra.mxu0 %v378
    %395 = vmatprep.subr.bf16.mxu0 0
    %396 = vmatpush1.bf16.msra.mxu0 %v377
    %397 = vmatprep.subr.bf16.mxu0 0
    %398 = vmatpush1.bf16.msra.mxu0 %v376
    %399 = vmatprep.subr.bf16.mxu0 0
    %400 = vmatpush1.bf16.msra.mxu0 %v375
    %401 = vmatprep.subr.bf16.mxu0 0
    %402 = vmatpush1.bf16.msra.mxu0 %v374
    %403 = vmatprep.subr.bf16.mxu0 0
    %404 = vmatpush1.bf16.msra.mxu0 %v373
    %405 = vmatprep.subr.bf16.mxu0 0
    %406 = vmatpush2.bf16.msra.mxu0 0
    %407 = vmatprep.subr.bf16.mxu0 0
    %408 = vmatpush2.bf16.msra.mxu0 0
    %409 = vmatprep.subr.bf16.mxu0 0
    %410 = vmatpush2.bf16.msra.mxu0 0
    %411 = vmatprep.subr.bf16.mxu0 0
    %412 = vmatpush2.bf16.msra.mxu0 0
    %413 = vmatprep.subr.bf16.mxu0 0
    %414 = vmatpush2.bf16.msra.mxu0 0
    %415 = vmatprep.subr.bf16.mxu0 0
    %416 = vmatpush2.bf16.msra.mxu0 0
    %417 = vmatprep.subr.bf16.mxu0 0
    %418 = vmatpush2.bf16.msra.mxu0 0
    %419 = vmatprep.subr.bf16.mxu0 0
    %420 = vmatpush2.bf16.msra.mxu0 0
    %421 = vmatprep.mubr.bf16.mxu0 0
    %422 = vmatmul.mubr.bf16.gmra.mxu0 %v317
    %v423 = vpop.f32.mrf.mxu0
    %v424 = vadd.f32 %v339, %v423
    %v425 = vpop.f32.mrf.mxu0
    %v426 = vpop.f32.mrf.mxu0
    %v427 = vadd.f32 %v339, %v426
    %v428 = vpop.f32.mrf.mxu0
    %429 = vdwg.mxu0
    %vm430 = vcmask 64512
    %431 = vst.msk [vmem:[%s7] sm:$0xff] %vm430, %v424
    %432 = vst.msk [vmem:[%s7 + $0x8] sm:$0xff] %vm430, %v427
    // Predicated region
    $region34: #{tpu_custom_call.1} parent=1 // pred_check
      _
    $region35: #{tpu_custom_call.1} parent=1 // pred_check_branch
      %434 = sbr.rel (0) target = $region37
    $region36: #{tpu_custom_call.1} parent=1 // pred_region
      _
    $region37: #{tpu_custom_call.1} parent=1 // pred_fallthru
      _
    // Predicated region
    $region38: #{tpu_custom_call.1} parent=1 // pred_check
      _
    $region39: #{tpu_custom_call.1} parent=1 // pred_check_branch
      %436 = sbr.rel (0) target = $region41
    $region40: #{tpu_custom_call.1} parent=1 // pred_region
      _
    $region41: #{tpu_custom_call.1} parent=1 // pred_fallthru
      _
    %437 = vsyncpa [#allocation3], 1

</llo_original>
